<compile_context>
chip_gen: v7x
topology: tpu7x:2x2x1
jax: 0.10.0
libtpu: 0.0.40
codegen_flags: <defaults>
</compile_context>

<pallas_src>
import functools

import jax
import jax.numpy as jnp
from jax import lax
from jax.experimental import pallas as pl
from jax.experimental.pallas import tpu as pltpu

HID = 24  # hidden width of the scorer MLP (nn.Linear(h_dim, 24))


def _round_up(x, m):
    return ((x + m - 1) // m) * m


def attn_kernel(x_ref, w1_ref, b1_ref, w2_ref, out_ref, logit_ref, *, n_chunks):
    """One batch-tile per grid step.

    x_ref    : (BT, S, H)   encoder outputs for BT batch elements
    w1_ref   : (H, HID), b1_ref: (1, HID)
    w2_ref   : (1, HID)     row view of Linear(24, 1) weight (bias dropped)
    out_ref  : (1, 1, BT*S) lane-dense softmax weights for this tile
    logit_ref: (BT, S)      f32 VMEM scratch holding the per-row logits
    """
    bt, s_len, h_dim = x_ref.shape
    hid = w1_ref.shape[1]
    cb = bt // n_chunks          # batch rows per inner chunk (static)
    rows = cb * s_len            # x rows fed to the MXU per chunk

    # Hoist weight loads / broadcasts out of the chunk loop.
    w1 = w1_ref[...]
    b1 = jnp.broadcast_to(b1_ref[...].astype(jnp.float32), (rows, hid))
    w2 = jnp.broadcast_to(w2_ref[...].astype(jnp.float32), (rows, hid))

    def chunk_body(c, carry):
        row0 = pl.multiple_of(c * cb, cb)
        # (cb, S, H) -> (cb*S, H): collapses leading dims only (free when S%8==0).
        xc = x_ref[pl.ds(row0, cb)].reshape(rows, h_dim)
        # Linear(h_dim, 24) + ReLU (MXU + VPU); accumulate in f32.
        h = jnp.dot(xc, w1, preferred_element_type=jnp.float32) + b1
        h = jnp.maximum(h, 0.0)
        # Linear(24, 1) as VPU multiply + XLU lane reduce (b2 is a softmax no-op).
        logits_c = jnp.sum((h * w2).reshape(cb, s_len, hid), axis=-1)  # (cb, S)
        logit_ref[pl.ds(row0, cb), :] = logits_c
        return carry

    lax.fori_loop(0, n_chunks, chunk_body, 0)

    # Per-batch-row softmax over the sequence (lane) axis, exact normalization.
    logits = logit_ref[...]
    m = jnp.max(logits, axis=-1, keepdims=True)
    e = jnp.exp(logits - m)
    denom = jnp.sum(e, axis=-1, keepdims=True)
    probs = e / denom

    # Lane-dense store: one (1, 1, BT*S) slab per grid step.
    out_ref[...] = probs.reshape(1, 1, bt * s_len).astype(out_ref.dtype)


def _pick_block_batch(B, S, H, itemsize=4, target_x_bytes=8 << 20):
    """Batch-tile size, budgeted against *padded VMEM* bytes of the x block
    (S rounds to 8 sublanes, H to 128 lanes).  The x tile is double-buffered,
    so ~8 MiB per buffer keeps 2*x + chunked intermediates + scratch well
    under the 32 MiB scoped-VMEM limit on every generation.  Also caps the
    tile so the grid has >= 2 steps (both TensorCores busy on v7x)."""
    s_pad = _round_up(S, 8)
    h_pad = _round_up(H, 128)
    per_batch = s_pad * h_pad * itemsize
    bt = max(1, target_x_bytes // per_batch)
    if B >= 2:
        bt = min(bt, -(-B // 2))     # ceil(B/2) -> at least 2 grid steps
    bt = min(bt, B)
    if bt >= 8:
        bt -= bt % 8                 # keep the batch tile sublane-aligned
    return max(1, bt)


def _pick_chunk_batch(bt, s, max_rows=2048):
    """Batch rows per inner MLP chunk: largest divisor of `bt` whose row count
    (cb * S) stays under ~max_rows, preferring multiples of 8, so the
    lane-padded (rows, 128) intermediates stay around ~1 MiB."""
    cap = max(1, max_rows // max(s, 1))
    if cap >= bt:
        return bt
    best, best8 = 1, 0
    for d in range(1, cap + 1):
        if bt % d == 0:
            best = d
            if d % 8 == 0:
                best8 = d
    return best8 if best8 else best


def attn_forward(x, w1, b1, w2, b2=None, *, block_batch=None, x_dtype=None,
                 chunk_rows=2048):
    """x: (B, S, H) -> (B, S, 1) softmax attention weights.

    `b2` is accepted for interface parity with the PyTorch module but unused:
    softmax is invariant to a constant shift of the logits (exact).
    `x_dtype=jnp.bfloat16` halves HBM traffic (MXU operands only).
    """
    B, S, H = x.shape
    hid = w1.shape[1]
    out_dtype = x.dtype

    if x_dtype is not None and x.dtype != x_dtype:
        x = x.astype(x_dtype)
        w1 = w1.astype(x_dtype)     # only the MXU operands go narrow

    itemsize = jnp.dtype(x.dtype).itemsize
    if block_batch is None:
        block_batch = _pick_block_batch(B, S, H, itemsize=itemsize)
    BT = max(1, min(int(block_batch), B))

    num_tiles = -(-B // BT)          # ceil: pad batch instead of asserting
    B_pad = num_tiles * BT
    if B_pad != B:
        x = jnp.pad(x, ((0, B_pad - B), (0, 0), (0, 0)))

    cb = _pick_chunk_batch(BT, S, max_rows=chunk_rows)
    n_chunks = BT // cb

    b1_2d = b1.reshape(1, hid).astype(jnp.float32)
    w2_row = w2.reshape(1, hid).astype(jnp.float32)

    kernel = functools.partial(attn_kernel, n_chunks=n_chunks)

    # TODO(synk): if S is not a multiple of 8, the in-kernel (BT,S,H)->(BT*S,H)
    # reshape materializes a relayout; padding S would need -inf logit masking.
    flat = pl.pallas_call(
        kernel,
        out_shape=jax.ShapeDtypeStruct((num_tiles, 1, BT * S), out_dtype),
        grid_spec=pltpu.PrefetchScalarGridSpec(
            num_scalar_prefetch=0,
            grid=(num_tiles,),
            in_specs=[
                pl.BlockSpec((BT, S, H), lambda g: (g, 0, 0)),
                pl.BlockSpec((H, hid), lambda g: (0, 0)),
                pl.BlockSpec((1, hid), lambda g: (0, 0)),
                pl.BlockSpec((1, hid), lambda g: (0, 0)),
            ],
            out_specs=pl.BlockSpec((1, 1, BT * S), lambda g: (g, 0, 0)),
            scratch_shapes=[pltpu.VMEM((BT, S), jnp.float32)],
        ),
        compiler_params=pltpu.CompilerParams(
            # Parallel batch-tile axis: shards grid steps across TensorCores.
            dimension_semantics=("parallel",),
            # Safe on v5e/v6e (128 MiB physical) and v7x (64 MiB physical).
            vmem_limit_bytes=32 * 1024 * 1024,
        ),
    )(x, w1, b1_2d, w2_row)

    # (num_tiles, 1, BT*S) -> (B_pad, S) -> drop batch padding, add unit dim.
    weights = flat.reshape(B_pad, S)[:B]
    return weights[..., None].astype(out_dtype)


def attn_reference(x, w1, b1, w2, b2):
    B, S, H = x.shape
    flat = x.reshape(-1, H)
    h = jnp.maximum(flat @ w1 + b1, 0.0)
    logits = (h @ w2.reshape(-1, 1) + b2).reshape(B, S)
    return jax.nn.softmax(logits, axis=1)[..., None]


if __name__ == "__main__":
    def make_params(key, H):
        k1, k2, k3, k4 = jax.random.split(key, 4)
        # nn.Linear default init: uniform(-1/sqrt(fan_in), 1/sqrt(fan_in)).
        lim1 = 1.0 / (H ** 0.5)
        w1 = jax.random.uniform(k1, (H, HID), jnp.float32, -lim1, lim1)
        b1 = jax.random.uniform(k2, (HID,), jnp.float32, -lim1, lim1)
        lim2 = 1.0 / (HID ** 0.5)
        w2 = jax.random.uniform(k3, (HID, 1), jnp.float32, -lim2, lim2)
        b2 = jax.random.uniform(k4, (1,), jnp.float32, -lim2, lim2)
        return w1, b1, w2, b2

    key = jax.random.PRNGKey(0)
    kx, kp, kx2 = jax.random.split(key, 3)

    # Small shapes matching the module: batch=2, seq=8, hidden=32.
    B, S, H = 2, 8, 32
    x = jax.random.normal(kx, (B, S, H), dtype=jnp.float32)
    w1, b1, w2, b2 = make_params(kp, H)

    out = jax.block_until_ready(attn_forward(x, w1, b1, w2, b2))
    ref = attn_reference(x, w1, b1, w2, b2)
    assert out.shape == (B, S, 1), out.shape
    assert jnp.allclose(out, ref, atol=1e-3, rtol=1e-3), (
        float(jnp.max(jnp.abs(out - ref))))
    # Exact-division softmax: rows sum to 1 tightly now.
    assert jnp.allclose(jnp.sum(out, axis=1), 1.0, atol=1e-4)

    # Multi-step grid path (user-chosen batch tile).
    B2 = 32
    x2 = jax.random.normal(kx2, (B2, S, H), dtype=jnp.float32)
    out2 = jax.block_until_ready(attn_forward(x2, w1, b1, w2, b2, block_batch=8))
    ref2 = attn_reference(x2, w1, b1, w2, b2)
    assert out2.shape == (B2, S, 1), out2.shape
    assert jnp.allclose(out2, ref2, atol=1e-3, rtol=1e-3), (
        float(jnp.max(jnp.abs(out2 - ref2))))

    # Auto tile selection (>= 2 grid steps) path.
    out2b = jax.block_until_ready(attn_forward(x2, w1, b1, w2, b2))
    assert jnp.allclose(out2b, ref2, atol=1e-3, rtol=1e-3)

    # Multi-chunk inner-loop path (tiny chunk_rows forces n_chunks > 1).
    out2c = jax.block_until_ready(
        attn_forward(x2, w1, b1, w2, b2, block_batch=8, chunk_rows=16))
    assert jnp.allclose(out2c, ref2, atol=1e-3, rtol=1e-3)

    # Optional bf16-activation path (HBM traffic halved; loose tolerance).
    out2d = jax.block_until_ready(
        attn_forward(x2, w1, b1, w2, b2, x_dtype=jnp.bfloat16))
    assert jnp.allclose(out2d, ref2, atol=5e-2, rtol=5e-2)

    print("KERNEL_OK")
</pallas_src>

<mosaic_0001>
module attributes {stable_mosaic.version = 11 : i64} {
  func.func @attn_kernel(%arg0: i32, %arg1: memref<1x8x32xf32, #tpu.memory_space<vmem>>, %arg2: memref<32x24xf32, #tpu.memory_space<vmem>>, %arg3: memref<1x24xf32, #tpu.memory_space<vmem>>, %arg4: memref<1x24xf32, #tpu.memory_space<vmem>>, %arg5: memref<1x1x8xf32, #tpu.memory_space<vmem>>, %arg6: memref<1x8xf32, #tpu.memory_space<vmem>>) attributes {dimension_semantics = [#tpu.dimension_semantics<parallel>], iteration_bounds = array<i64: 2>, scalar_prefetch = 0 : i64, scratch_operands = 1 : i64, tpu.core_type = #tpu.core_type<tc>, window_params = [{transform_indices = @transform_0, window_bounds = array<i64: 1, 8, 32>}, {pipeline_mode = #tpu.pipeline_mode<synchronous>, transform_indices = @transform_1, window_bounds = array<i64: 32, 24>}, {pipeline_mode = #tpu.pipeline_mode<synchronous>, transform_indices = @transform_2, window_bounds = array<i64: 1, 24>}, {pipeline_mode = #tpu.pipeline_mode<synchronous>, transform_indices = @transform_3, window_bounds = array<i64: 1, 24>}, {transform_indices = @transform_4, window_bounds = array<i64: 1, 1, 8>}]} {
    %c0 = arith.constant 0 : index
    %c0_0 = arith.constant 0 : index
    %0 = vector.load %arg2[%c0, %c0_0] : memref<32x24xf32, #tpu.memory_space<vmem>>, vector<32x24xf32>
    %c0_1 = arith.constant 0 : index
    %c0_2 = arith.constant 0 : index
    %1 = vector.load %arg3[%c0_1, %c0_2] : memref<1x24xf32, #tpu.memory_space<vmem>>, vector<1x24xf32>
    %2 = vector.shape_cast %1 : vector<1x24xf32> to vector<1x24xf32>
    %3 = vector.broadcast %2 : vector<1x24xf32> to vector<8x24xf32>
    %c0_3 = arith.constant 0 : index
    %c0_4 = arith.constant 0 : index
    %4 = vector.load %arg4[%c0_3, %c0_4] : memref<1x24xf32, #tpu.memory_space<vmem>>, vector<1x24xf32>
    %5 = vector.shape_cast %4 : vector<1x24xf32> to vector<1x24xf32>
    %6 = vector.broadcast %5 : vector<1x24xf32> to vector<8x24xf32>
    %c0_i32 = arith.constant 0 : i32
    %c1_i32 = arith.constant 1 : i32
    %7 = arith.muli %c0_i32, %c1_i32 : i32
    %8 = tpu.assume_multiple %7, 1 : i32
    %9 = arith.index_cast %8 : i32 to index
    %c0_5 = arith.constant 0 : index
    %c0_6 = arith.constant 0 : index
    %10 = vector.load %arg1[%9, %c0_5, %c0_6] : memref<1x8x32xf32, #tpu.memory_space<vmem>>, vector<1x8x32xf32>
    %11 = vector.shape_cast %10 : vector<1x8x32xf32> to vector<8x32xf32>
    %cst = arith.constant dense<0.000000e+00> : vector<8x24xf32>
    %12 = tpu.matmul %11, %0, %cst {dimension_numbers = #tpu.dot_dimension_numbers<[1], [0], [0], [1], [0, 0, 1, 1], [], []>} : vector<8x32xf32>, vector<32x24xf32>, vector<8x24xf32> -> vector<8x24xf32>
    %13 = arith.addf %12, %3 : vector<8x24xf32>
    %cst_7 = arith.constant 0.000000e+00 : f32
    %14 = vector.broadcast %cst_7 : f32 to vector<8x24xf32>
    %15 = arith.maximumf %13, %14 : vector<8x24xf32>
    %16 = arith.mulf %15, %6 : vector<8x24xf32>
    %17 = vector.shape_cast %16 : vector<8x24xf32> to vector<1x8x24xf32>
    %cst_8 = arith.constant dense<0.000000e+00> : vector<1x8xf32>
    %18 = vector.multi_reduction <add>, %17, %cst_8 [2] : vector<1x8x24xf32> to vector<1x8xf32>
    %19 = arith.index_cast %8 : i32 to index
    %c0_9 = arith.constant 0 : index
    %20 = vector.load %arg6[%19, %c0_9] : memref<1x8xf32, #tpu.memory_space<vmem>>, vector<1x8xf32>
    tpu.vector_store %arg6[%19, %c0_9], %18 {strides = array<i32>} : memref<1x8xf32, #tpu.memory_space<vmem>>, vector<1x8xf32>,
    %c1_i32_10 = arith.constant 1 : i32
    %c0_11 = arith.constant 0 : index
    %c0_12 = arith.constant 0 : index
    %21 = vector.load %arg6[%c0_11, %c0_12] : memref<1x8xf32, #tpu.memory_space<vmem>>, vector<1x8xf32>
    %cst_13 = arith.constant dense<0xFF800000> : vector<1xf32>
    %22 = vector.multi_reduction <maximumf>, %21, %cst_13 [1] : vector<1x8xf32> to vector<1xf32>
    %23 = vector.shape_cast %22 : vector<1xf32> to vector<1x1xf32>
    %24 = vector.broadcast %23 : vector<1x1xf32> to vector<1x8xf32>
    %25 = arith.subf %21, %24 : vector<1x8xf32>
    %26 = math.exp %25 : vector<1x8xf32>
    %cst_14 = arith.constant dense<0.000000e+00> : vector<1xf32>
    %27 = vector.multi_reduction <add>, %26, %cst_14 [1] : vector<1x8xf32> to vector<1xf32>
    %28 = vector.shape_cast %27 : vector<1xf32> to vector<1x1xf32>
    %29 = vector.broadcast %28 : vector<1x1xf32> to vector<1x8xf32>
    %30 = arith.divf %26, %29 : vector<1x8xf32>
    %31 = vector.shape_cast %30 : vector<1x8xf32> to vector<1x1x8xf32>
    %c0_15 = arith.constant 0 : index
    %c0_16 = arith.constant 0 : index
    %c0_17 = arith.constant 0 : index
    %32 = vector.load %arg5[%c0_15, %c0_16, %c0_17] : memref<1x1x8xf32, #tpu.memory_space<vmem>>, vector<1x1x8xf32>
    tpu.vector_store %arg5[%c0_15, %c0_16, %c0_17], %31 {strides = array<i32>} : memref<1x1x8xf32, #tpu.memory_space<vmem>>, vector<1x1x8xf32>,
    return
  }
  func.func @transform_0(%arg0: i32) -> (i32, i32, i32) {
    %c0_i32 = arith.constant 0 : i32
    %c0_i32_0 = arith.constant 0 : i32
    %c0_i32_1 = arith.constant 0 : i32
    return %arg0, %c0_i32, %c0_i32_0 : i32, i32, i32
  }
  func.func @transform_1(%arg0: i32) -> (i32, i32) {
    %c0_i32 = arith.constant 0 : i32
    %c0_i32_0 = arith.constant 0 : i32
    %c0_i32_1 = arith.constant 0 : i32
    return %c0_i32, %c0_i32_0 : i32, i32
  }
  func.func @transform_2(%arg0: i32) -> (i32, i32) {
    %c0_i32 = arith.constant 0 : i32
    %c0_i32_0 = arith.constant 0 : i32
    %c0_i32_1 = arith.constant 0 : i32
    return %c0_i32, %c0_i32_0 : i32, i32
  }
  func.func @transform_3(%arg0: i32) -> (i32, i32) {
    %c0_i32 = arith.constant 0 : i32
    %c0_i32_0 = arith.constant 0 : i32
    %c0_i32_1 = arith.constant 0 : i32
    return %c0_i32, %c0_i32_0 : i32, i32
  }
  func.func @transform_4(%arg0: i32) -> (i32, i32, i32) {
    %c0_i32 = arith.constant 0 : i32
    %c0_i32_0 = arith.constant 0 : i32
    %c0_i32_1 = arith.constant 0 : i32
    return %arg0, %c0_i32, %c0_i32_0 : i32, i32, i32
  }
}

</mosaic_0001>

<llo_original>
// kernel: tpu_custom_call.1
$region0: #{tpu_custom_call.1}
  #allocation0 [shape = 'u32[]', space=smem, size = 0x4, offset = 0x4, fixed_abs, tag = 'smem constant byte address 0x4 - core index']
  #allocation1 [shape = 'u32[144,128]{1,0:T(1,128)}', space=vmem, size = 0x12000, scoped, tag = 'internal scratch']
  #allocation2 [shape = 'f32[1,8]{1,0:T(1,128)}', space=vmem, size = 0x200, scoped, tag = 'scratch operand']
  %s0 = inlined_call_operand.vmem [shape: f32[2,8,32], index: 0, kind: input, shape index: {}]
  %s1 = inlined_call_operand.vmem [shape: f32[32,24], index: 1, kind: input, shape index: {}]
  %s2 = inlined_call_operand.vmem [shape: f32[1,24], index: 2, kind: input, shape index: {}]
  %s3 = inlined_call_operand.vmem [shape: f32[1,24], index: 3, kind: input, shape index: {}]
  %s4 = inlined_call_operand.hbm [shape: f32[2,1,8], index: 4, kind: output, shape index: {}]
  %s5 = sld [smem:[#allocation0]]
  $region49: #{tpu_custom_call.1} parent=0
    _
  %s7 = ssub.s32 1, %s5
  %s8 = scalar_select 0, %s7, %s5
  $region1: #{tpu_custom_call.1} parent=0
    #allocation3 [shape = 'u8[1024]{0}', space=vmem, size = 0x400, scoped, tag = 'output window, operand 0']
    #allocation4 [shape = 's32[2]{0}', space=sflag, size = 0x8, scoped, tag = 'scoped memory for tpu_custom_call.1']
    %9 = vsyncpa [#allocation4], 0
    %s10 = scalar_lea.sflag [#allocation4], 1
    %11 = vsyncpa %s10, 0
    loop: start=0, step=1, limit=4
    $region2: #{tpu_custom_call.1} parent=1 // loop_pre_header
      _
    $region3: #{tpu_custom_call.1} parent=1 // loop_header
      %s13 = sphi 0, %s17
      %p14 = scmp.ge.s32.totalorder %s13, 4
      %s23 = sphi 0, %s25
      %s26 = sphi 0, %s23
      %s27 = sphi 0, %s26
      %s43 = sphi 0, %s27
      %s47 = sphi 0, %s47
      %s49 = sphi 0, %s47
      %s50 = sphi 0, %s49
      %s64 = sphi 0, %s50
      %s68 = sphi 0, %s68
      %s70 = sphi 0, %s68
      %s71 = sphi 0, %s70
      %s85 = sphi 0, %s71
      %s89 = sphi 0, %s89
      %s91 = sphi 0, %s89
      %s92 = sphi 0, %s91
      %s106 = sphi 0, %s92
      %s112 = sphi 0, %s114
      %s115 = sphi 0, %s112
      %s116 = sphi 0, %s115
      %s132 = sphi 0, %s116
    $region4: #{tpu_custom_call.1} parent=1 // loop_header_branch
      %16 = sbr.rel (%p14) target = $region8
    $region5: #{tpu_custom_call.1} parent=1 // loop_body
      %s18 = ssub.s32 %s13, 1
      %s19 = ssub.s32 %s13, 2
      %s20 = sadd.s32 %s13, 1
      %s21 = ssub.s32 %s13, %s20
      %p22 = scmp.eq.s32.totalorder %s21, 0
      %s24 = sadd.s32 %s23, 1
      %s25 = scalar_select %p22, %s23, %s24
      %p28 = pneg %p22
      %p29 = scmp.eq.s32.totalorder %s13, 1
      %p30 = por %p28, %p29
      %p31 = scmp.ne.s32.totalorder %s23, %s26
      %p32 = scmp.eq.s32.totalorder %s13, 0
      %p33 = por %p31, %p32
      %p34 = scmp.ne.s32.totalorder %s23, %s26
      %p35 = scmp.eq.s32.totalorder %s18, 1
      %p36 = por %p34, %p35
      %p37 = scmp.ne.s32.totalorder %s26, %s27
      %p38 = scmp.eq.s32.totalorder %s18, 0
      %p39 = por %p37, %p38
      %p40 = scmp.ne.s32.totalorder %s26, %s27
      %p41 = scmp.eq.s32.totalorder %s19, 1
      %p42 = por %p40, %p41
      %p44 = scmp.ne.s32.totalorder %s27, %s43
      %p45 = scmp.eq.s32.totalorder %s19, 0
      %p46 = por %p44, %p45
      %s48 = sadd.s32 %s47, 1
      %p51 = scmp.eq.s32.totalorder %s13, 1
      %p52 = scmp.ne.s32.totalorder %s47, %s49
      %p53 = scmp.eq.s32.totalorder %s13, 0
      %p54 = por %p52, %p53
      %p55 = scmp.ne.s32.totalorder %s47, %s49
      %p56 = scmp.eq.s32.totalorder %s18, 1
      %p57 = por %p55, %p56
      %p58 = scmp.ne.s32.totalorder %s49, %s50
      %p59 = scmp.eq.s32.totalorder %s18, 0
      %p60 = por %p58, %p59
      %p61 = scmp.ne.s32.totalorder %s49, %s50
      %p62 = scmp.eq.s32.totalorder %s19, 1
      %p63 = por %p61, %p62
      %p65 = scmp.ne.s32.totalorder %s50, %s64
      %p66 = scmp.eq.s32.totalorder %s19, 0
      %p67 = por %p65, %p66
      %s69 = sadd.s32 %s68, 1
      %p72 = scmp.eq.s32.totalorder %s13, 1
      %p73 = scmp.ne.s32.totalorder %s68, %s70
      %p74 = scmp.eq.s32.totalorder %s13, 0
      %p75 = por %p73, %p74
      %p76 = scmp.ne.s32.totalorder %s68, %s70
      %p77 = scmp.eq.s32.totalorder %s18, 1
      %p78 = por %p76, %p77
      %p79 = scmp.ne.s32.totalorder %s70, %s71
      %p80 = scmp.eq.s32.totalorder %s18, 0
      %p81 = por %p79, %p80
      %p82 = scmp.ne.s32.totalorder %s70, %s71
      %p83 = scmp.eq.s32.totalorder %s19, 1
      %p84 = por %p82, %p83
      %p86 = scmp.ne.s32.totalorder %s71, %s85
      %p87 = scmp.eq.s32.totalorder %s19, 0
      %p88 = por %p86, %p87
      %s90 = sadd.s32 %s89, 1
      %p93 = scmp.eq.s32.totalorder %s13, 1
      %p94 = scmp.ne.s32.totalorder %s89, %s91
      %p95 = scmp.eq.s32.totalorder %s13, 0
      %p96 = por %p94, %p95
      %p97 = scmp.ne.s32.totalorder %s89, %s91
      %p98 = scmp.eq.s32.totalorder %s18, 1
      %p99 = por %p97, %p98
      %p100 = scmp.ne.s32.totalorder %s91, %s92
      %p101 = scmp.eq.s32.totalorder %s18, 0
      %p102 = por %p100, %p101
      %p103 = scmp.ne.s32.totalorder %s91, %s92
      %p104 = scmp.eq.s32.totalorder %s19, 1
      %p105 = por %p103, %p104
      %p107 = scmp.ne.s32.totalorder %s92, %s106
      %p108 = scmp.eq.s32.totalorder %s19, 0
      %p109 = por %p107, %p108
      %s110 = ssub.s32 %s13, %s20
      %p111 = scmp.eq.s32.totalorder %s110, 0
      %s113 = sadd.s32 %s112, 1
      %s114 = scalar_select %p111, %s112, %s113
      %p117 = pneg %p111
      %p118 = scmp.eq.s32.totalorder %s13, 1
      %p119 = por %p117, %p118
      %p120 = scmp.ne.s32.totalorder %s112, %s115
      %p121 = scmp.eq.s32.totalorder %s13, 0
      %p122 = por %p120, %p121
      %p123 = scmp.ne.s32.totalorder %s112, %s115
      %p124 = scmp.eq.s32.totalorder %s18, 1
      %p125 = por %p123, %p124
      %p126 = scmp.ne.s32.totalorder %s115, %s116
      %p127 = scmp.eq.s32.totalorder %s18, 0
      %p128 = por %p126, %p127
      %p129 = scmp.ne.s32.totalorder %s115, %s116
      %p130 = scmp.eq.s32.totalorder %s19, 1
      %p131 = por %p129, %p130
      %p133 = scmp.ne.s32.totalorder %s116, %s132
      %p134 = scmp.eq.s32.totalorder %s19, 0
      %p135 = por %p133, %p134
      %p136 = scmp.le.s32.totalorder 1, %s13
      %p137 = scmp.lt.s32.totalorder %s13, 3
      %p138 = pnand %p136, %p137
      %p139 = pneg %p138
      // Predicated region
      $region9: #{tpu_custom_call.1} parent=5 // pred_check
        _
      $region10: #{tpu_custom_call.1} parent=5 // pred_check_branch
        %141 = sbr.rel (%p138) target = $region12
      $region11: #{tpu_custom_call.1} parent=5 // pred_region
        %s142 = ssub.s32 %s13, 1
        // Predicated region
        $region13: #{tpu_custom_call.1} parent=11 // pred_check
          %p143 = pneg %p60
        $region14: #{tpu_custom_call.1} parent=11 // pred_check_branch
          %145 = sbr.rel (%p143) target = $region16
        $region15: #{tpu_custom_call.1} parent=11 // pred_region
          _
        $region16: #{tpu_custom_call.1} parent=11 // pred_fallthru
          _
        // Predicated region
        $region17: #{tpu_custom_call.1} parent=11 // pred_check
          %p146 = pneg %p81
        $region18: #{tpu_custom_call.1} parent=11 // pred_check_branch
          %148 = sbr.rel (%p146) target = $region20
        $region19: #{tpu_custom_call.1} parent=11 // pred_region
          _
        $region20: #{tpu_custom_call.1} parent=11 // pred_fallthru
          _
        // Predicated region
        $region21: #{tpu_custom_call.1} parent=11 // pred_check
          %p149 = pneg %p102
        $region22: #{tpu_custom_call.1} parent=11 // pred_check_branch
          %151 = sbr.rel (%p149) target = $region24
        $region23: #{tpu_custom_call.1} parent=11 // pred_region
          _
        $region24: #{tpu_custom_call.1} parent=11 // pred_fallthru
          _
      $region12: #{tpu_custom_call.1} parent=5 // pred_fallthru
        _
      %p152 = scmp.lt.s32.totalorder %s13, 2
      // Predicated region
      $region25: #{tpu_custom_call.1} parent=5 // pred_check
        %p153 = pneg %p152
      $region26: #{tpu_custom_call.1} parent=5 // pred_check_branch
        %155 = sbr.rel (%p153) target = $region28
      $region27: #{tpu_custom_call.1} parent=5 // pred_region
        // Predicated region
        $region29: #{tpu_custom_call.1} parent=27 // pred_check
          %p156 = pneg %p33
        $region30: #{tpu_custom_call.1} parent=27 // pred_check_branch
          %158 = sbr.rel (%p156) target = $region32
        $region31: #{tpu_custom_call.1} parent=27 // pred_region
          %p159 = scmp.lt.s32.totalorder %s13, 1
          %s160 = scalar_select %p159, %s13, 1
          %s161 = smul.addr %s160, 8
          %s162 = scalar_lea.vmem %s0, %s161
        $region32: #{tpu_custom_call.1} parent=27 // pred_fallthru
          _
      $region28: #{tpu_custom_call.1} parent=5 // pred_fallthru
        _
      %p163 = scmp.le.s32.totalorder 1, %s13
      %p164 = scmp.lt.s32.totalorder %s13, 3
      %p165 = pnand %p163, %p164
      %p166 = pneg %p165
      // Predicated region
      $region33: #{tpu_custom_call.1} parent=5 // pred_check
        _
      $region34: #{tpu_custom_call.1} parent=5 // pred_check_branch
        %168 = sbr.rel (%p165) target = $region36
      $region35: #{tpu_custom_call.1} parent=5 // pred_region
        %s169 = ssub.s32 %s13, 1
        %p170 = scmp.lt.s32.totalorder %s18, 1
        %s171 = scalar_select %p170, %s18, 1
        %s172 = smul.addr %s171, 8
        %s173 = scalar_lea.vmem %s0, %s172
        %p174 = pneg %p39
        %p175 = pneg %p36
        %p176 = pneg %p60
        %p177 = pneg %p57
        %p178 = pneg %p81
        %p179 = pneg %p78
        %p180 = pneg %p102
        %p181 = pneg %p99
        %p182 = pneg %p128
        %p183 = pneg %p125
        %s184 = sand.u32 %s115, 1
        %s185 = scalar_lea.sflag [#allocation4], %s184
        %s186 = sand.u32 %s115, 1
        %s187 = scalar_lea.vmem [#allocation3], %s186
        %p188 = scmp.lt.s32.totalorder %s18, 1
        %s189 = scalar_select %p188, %s18, 1
        %s190 = smul.addr %s189, 8
        %s191 = scalar_lea.vmem %s0, %s190
        %v192 = vld [vmem:[%s1] sm:$0xff]
        %v193 = vld [vmem:[%s1 + $0x8] sm:$0xff]
        %v194 = vld [vmem:[%s1 + $0x10] sm:$0xff]
        %v195 = vld [vmem:[%s1 + $0x18] sm:$0xff]
        %v196 = vld [vmem:[%s2] sm:$0x1]
        %v198 = vlaneseq
        %v199 = vshrl.u32 %v198, 7
        %v200 = vsub.s32 0, %v199
        %v201 = vrot.slane %v196, %v200
        %v203 = vld [vmem:[%s3] sm:$0x1]
        %v205 = vlaneseq
        %v206 = vshrl.u32 %v205, 7
        %v207 = vsub.s32 0, %v206
        %v208 = vrot.slane %v203, %v207
        %s210 = smul.u32 0, 8
        %s211 = scalar_lea.vmem %s191, %s210
        %v212 = vld [vmem:[%s211] sm:$0xff]
        %vm213 = vcmask 261120
        %v215 = vsel %vm213, %v212, 0
        %217 = vmatprep.subr.mxu0 0.0
        %218 = vmatpush1.msra.mxu0 %v192
        %219 = vmatprep.subr.mxu0 0.0
        %220 = vmatpush1.msra.mxu0 %v193
        %221 = vmatprep.subr.mxu0 0.0
        %222 = vmatpush1.msra.mxu0 %v194
        %223 = vmatprep.subr.mxu0 0.0
        %224 = vmatpush1.msra.mxu0 %v195
        %225 = vmatprep.subr.mxu0 0.0
        %226 = vmatpush1.msra.mxu0 0.0
        %227 = vmatprep.subr.mxu0 0.0
        %228 = vmatpush1.msra.mxu0 0.0
        %229 = vmatprep.subr.mxu0 0.0
        %230 = vmatpush1.msra.mxu0 0.0
        %231 = vmatprep.subr.mxu0 0.0
        %232 = vmatpush1.msra.mxu0 0.0
        %233 = vmatprep.subr.mxu0 0.0
        %234 = vmatpush1.msra.mxu0 0.0
        %235 = vmatprep.subr.mxu0 0.0
        %236 = vmatpush1.msra.mxu0 0.0
        %237 = vmatprep.subr.mxu0 0.0
        %238 = vmatpush1.msra.mxu0 0.0
        %239 = vmatprep.subr.mxu0 0.0
        %240 = vmatpush1.msra.mxu0 0.0
        %241 = vmatprep.subr.mxu0 0.0
        %242 = vmatpush1.msra.mxu0 0.0
        %243 = vmatprep.subr.mxu0 0.0
        %244 = vmatpush1.msra.mxu0 0.0
        %245 = vmatprep.subr.mxu0 0.0
        %246 = vmatpush1.msra.mxu0 0.0
        %247 = vmatprep.subr.mxu0 0.0
        %248 = vmatpush1.msra.mxu0 0.0
        %249 = vmatprep.subr.mxu0 0.0
        %250 = vmatpush1.msra.mxu0 0.0
        %251 = vmatprep.subr.mxu0 0.0
        %252 = vmatpush1.msra.mxu0 0.0
        %253 = vmatprep.subr.mxu0 0.0
        %254 = vmatpush1.msra.mxu0 0.0
        %255 = vmatprep.subr.mxu0 0.0
        %256 = vmatpush1.msra.mxu0 0.0
        %257 = vmatprep.subr.mxu0 0.0
        %258 = vmatpush1.msra.mxu0 0.0
        %259 = vmatprep.subr.mxu0 0.0
        %260 = vmatpush1.msra.mxu0 0.0
        %261 = vmatprep.subr.mxu0 0.0
        %262 = vmatpush1.msra.mxu0 0.0
        %263 = vmatprep.subr.mxu0 0.0
        %264 = vmatpush1.msra.mxu0 0.0
        %265 = vmatprep.subr.mxu0 0.0
        %266 = vmatpush1.msra.mxu0 0.0
        %267 = vmatprep.subr.mxu0 0.0
        %268 = vmatpush1.msra.mxu0 0.0
        %269 = vmatprep.subr.mxu0 0.0
        %270 = vmatpush1.msra.mxu0 0.0
        %271 = vmatprep.subr.mxu0 0.0
        %272 = vmatpush1.msra.mxu0 0.0
        %273 = vmatprep.subr.mxu0 0.0
        %274 = vmatpush1.msra.mxu0 0.0
        %275 = vmatprep.subr.mxu0 0.0
        %276 = vmatpush1.msra.mxu0 0.0
        %277 = vmatprep.subr.mxu0 0.0
        %278 = vmatpush1.msra.mxu0 0.0
        %279 = vmatprep.subr.mxu0 0.0
        %280 = vmatpush1.msra.mxu0 0.0
        %281 = vmatprep.mubr.f32.mxu0 0.0
        %282 = vmatmul.mubr.f32.gmra.mrb[0].mxu0 %v215
        %v283 = vpop.f32.mrb[0].mxu0
        %v284 = vadd.f32 %v201, %v283
        %v285 = vpop.f32.mrb[0].mxu0
        %286 = vdwg.mxu0
        %v287 = vmax.f32 %v284, 0.0
        %v288 = vmul.f32 %v287, %v208
        %vm289 = vcmask 195584
        %v290 = vsel %vm289, %v288, 0.0
        %291 = vadd.xlane.f32.xlu0 %v290
        %v292 = vpop.xlane.xlu0 %291
        %v294 = vlaneseq
        %v295 = vand.u32 %v294, 127
        %v296 = vlaneseq
        %v297 = vshrl.u32 %v296, 7
        %v298 = vsub.s32 %v295, %v297
        %v299 = vrot.slane %v292, %v298
        %vm301 = vcmask 57344
        %302 = vst.msk [vmem:[#allocation2] sm:$0x1] %vm301, %v299
        %v303 = vld [vmem:[#allocation2] sm:$0x1]
        %v304 = vsel %vm301, %v303, -inf
        %305 = vmax.xlane.f32.xlu0 %v304
        %v306 = vpop.xlane.xlu0 %305
        %v307 = vsub.f32 %v303, %v306
        %v308 = vmul.f32 %v307, 1.442695
        %v309 = vpow.pop %v308
        %v310 = vsel %vm301, %v309, 0.0
        %311 = vadd.xlane.f32.xlu0 %v310
        %v312 = vpop.xlane.xlu0 %311
        %v313 = vrcp.pop %v312
        %v314 = vmul.f32 %v309, %v313
        %315 = vst.msk [vmem:[%s187] sm:$0x1] %vm301, %v314
        %s316 = sand.u32 %s115, 1
        %s317 = scalar_lea.sflag [#allocation4], %s316
        %s318 = sand.u32 %s115, 1
        %s319 = scalar_lea.vmem [#allocation3], %s318
        // Predicated region
        $region37: #{tpu_custom_call.1} parent=35 // pred_check
          %p320 = pneg %p125
        $region38: #{tpu_custom_call.1} parent=35 // pred_check_branch
          %322 = sbr.rel (%p320) target = $region40
        $region39: #{tpu_custom_call.1} parent=35 // pred_region
          %s324 = ssub.s32 16, 16
          %325 = vsyncadd %s317, %s324
          %s326 = smul.addr %s18, 16
          %s327 = scalar_lea.hbm %s4, %s326
          %s329 = sshll.u32 %s319, 4
          %s330 = int_to_ptr.vmem [resolvable:$true] %s329
          %332 = dma.vmem_to_hbm [thread:$0]  %s330, 16, %s327, %s317
        $region40: #{tpu_custom_call.1} parent=35 // pred_fallthru
          _
      $region36: #{tpu_custom_call.1} parent=5 // pred_fallthru
        _
      %p333 = scmp.le.s32.totalorder 2, %s13
      // Predicated region
      $region41: #{tpu_custom_call.1} parent=5 // pred_check
        %p334 = pneg %p333
      $region42: #{tpu_custom_call.1} parent=5 // pred_check_branch
        %336 = sbr.rel (%p334) target = $region44
      $region43: #{tpu_custom_call.1} parent=5 // pred_region
        %s337 = ssub.s32 %s13, 2
        // Predicated region
        $region45: #{tpu_custom_call.1} parent=43 // pred_check
          %p338 = pneg %p131
        $region46: #{tpu_custom_call.1} parent=43 // pred_check_branch
          %340 = sbr.rel (%p338) target = $region48
        $region47: #{tpu_custom_call.1} parent=43 // pred_region
          %s341 = sand.u32 %s116, 1
          %s342 = scalar_lea.sflag [#allocation4], %s341
          %s343 = sand.u32 %s116, 1
          %s344 = scalar_lea.vmem [#allocation3], %s343
          %345 = dma.done %s342, 16
        $region48: #{tpu_custom_call.1} parent=43 // pred_fallthru
          _
      $region44: #{tpu_custom_call.1} parent=5 // pred_fallthru
        _
    $region6: #{tpu_custom_call.1} parent=1 // loop_footer
      %s17 = sadd.s32 1, %s13
    $region7: #{tpu_custom_call.1} parent=1 // loop_footer_branch
      %12 = sbr.rel target = $region3
    $region8: #{tpu_custom_call.1} parent=1 // loop_exit
      _
    %346 = vsyncpa [#allocation4], 1
    %s347 = scalar_lea.sflag [#allocation4], 1
    %348 = vsyncpa %s347, 1

</llo_original>
